<compile_context>
chip_gen: v7x
topology: tpu7x:2x2x1
jax: 0.10.0
libtpu: 0.0.40
codegen_flags: <defaults>
</compile_context>

<pallas_src>
import jax
import jax.numpy as jnp
from jax.experimental import pallas as pl
from jax.experimental.pallas import tpu as pltpu


def _round_up(x, m):
    return (x + m - 1) // m * m


def critic_kernel(sa_ref, w12_ref, b12_ref, w3_ref, b3_ref, o_ref):
    # Fused input projection: [TB, S+A] @ [S+A, Hp]  (f32 accumulation on MXU).
    h = jnp.dot(sa_ref[...], w12_ref[...], preferred_element_type=jnp.float32)
    # Folded bias + ReLU in f32 on the VPU (lane-dense: Hp % 128 == 0).
    h = jnp.maximum(h + b12_ref[...], 0.0)
    # Output head: N=1 is too narrow for the MXU -> VPU mul + XLU lane reduce.
    q = jnp.sum(h * w3_ref[...], axis=-1, keepdims=True) + b3_ref[0, 0]
    o_ref[...] = q.astype(o_ref.dtype)


def fuse_params(params, *, hidden_pad=128):
    """Fold (w1,b1,w2,b2,w3,b3) into the fused / lane-padded layout.

    Returns (w12, b12, w3_row, b3):
      w12    : [S+A, Hp]  stacked input-projection weights (Hp = round_up(H, 128))
      b12    : [1,  Hp]   b1 + b2, zero in padded columns
      w3_row : [1,  Hp]   head weights as a row, zero in padded columns
      b3     : [1, 1]     scalar head bias (goes to SMEM)
    """
    w1, b1, w2, b2, w3, b3 = params
    hidden = w1.shape[1]
    hp = _round_up(hidden, hidden_pad)
    pad = hp - hidden

    w12 = jnp.concatenate([w1, w2], axis=0)        # [S+A, H]
    b12 = b1 + b2                                  # [1, H]
    w3_row = w3.reshape(1, hidden)                 # [1, H]
    if pad:
        w12 = jnp.pad(w12, ((0, 0), (0, pad)))
        b12 = jnp.pad(b12, ((0, 0), (0, pad)))
        w3_row = jnp.pad(w3_row, ((0, 0), (0, pad)))
    return w12, b12, w3_row, b3.reshape(1, 1)


def critic_forward(state, action, fused_params, *, block_b=1024,
                   compute_dtype=jnp.float32):
    """Fused Critic forward.

    state: [B, S], action: [B, A]; fused_params from `fuse_params`.
    `compute_dtype` applies only to the MXU operands (batch stream + W12);
    accumulation, bias add, ReLU and the output head stay in f32.
    """
    w12, b12, w3_row, b3 = fused_params
    B = state.shape[0]
    K = w12.shape[0]            # S + A
    Hp = w12.shape[1]

    # Fuse the two projections into one matmul operand.
    sa = jnp.concatenate([state, action], axis=-1).astype(compute_dtype)
    w12 = w12.astype(compute_dtype)

    # Batch tile: multiple of 16 sublanes (covers bf16 packing), capped by
    # block_b to keep 2 buffers x tile well under scoped VMEM on v7x (64 MiB).
    tb = min(block_b, _round_up(B, 16))
    grid = (pl.cdiv(B, tb),)

    itemsize = jnp.dtype(compute_dtype).itemsize
    cost = pl.CostEstimate(
        flops=2 * B * K * Hp + 3 * B * Hp,
        transcendentals=0,
        bytes_accessed=(B * K * itemsize        # batch stream in
                        + B * 4                 # q out
                        + K * Hp * itemsize     # W12
                        + 2 * Hp * 4 + 4),      # b12, w3_row, b3
    )

    return pl.pallas_call(
        critic_kernel,
        out_shape=jax.ShapeDtypeStruct((B, 1), jnp.float32),
        grid=grid,
        in_specs=[
            pl.BlockSpec((tb, K), lambda i: (i, 0)),             # batch stream
            pl.BlockSpec((K, Hp), lambda i: (0, 0)),             # W12 (resident)
            pl.BlockSpec((1, Hp), lambda i: (0, 0)),             # b12 (resident)
            pl.BlockSpec((1, Hp), lambda i: (0, 0)),             # w3 row (resident)
            pl.BlockSpec(memory_space=pltpu.MemorySpace.SMEM),   # b3 scalar
        ],
        out_specs=pl.BlockSpec((tb, 1), lambda i: (i, 0)),
        compiler_params=pltpu.CompilerParams(
            dimension_semantics=("parallel",),   # v7x: shard batch over 2 TCs
        ),
        cost_estimate=cost,
    )(sa, w12, b12, w3_row, b3)


def init_params(key, state_dim, action_dim, hidden):
    """Deterministic synthetic init (PyTorch-like uniform(-1/sqrt(fan_in), +))."""
    ks = jax.random.split(key, 6)

    def lin(kw, kb, fan_in, fan_out):
        bound = 1.0 / jnp.sqrt(fan_in)
        w = jax.random.uniform(kw, (fan_in, fan_out), jnp.float32, -bound, bound)
        b = jax.random.uniform(kb, (1, fan_out), jnp.float32, -bound, bound)
        return w, b

    w1, b1 = lin(ks[0], ks[1], state_dim, hidden)
    w2, b2 = lin(ks[2], ks[3], action_dim, hidden)
    w3, b3 = lin(ks[4], ks[5], hidden, 1)
    return (w1, b1, w2, b2, w3, b3)


def critic_reference(state, action, params):
    """Pure-JAX reference matching the PyTorch module semantics."""
    w1, b1, w2, b2, w3, b3 = params
    hi = jax.lax.Precision.HIGHEST
    x = jnp.dot(state, w1, precision=hi) + b1
    y = jnp.dot(action, w2, precision=hi) + b2
    h = jnp.maximum(x + y, 0.0)
    return jnp.dot(h, w3, precision=hi) + b3


if __name__ == "__main__":
    key = jax.random.PRNGKey(0)
    k_s, k_a, k_p = jax.random.split(key, 3)

    batch = 8
    state_dim = 16
    action_dim = 8
    hidden = 32

    state = jax.random.normal(k_s, (batch, state_dim), jnp.float32)
    action = jax.random.normal(k_a, (batch, action_dim), jnp.float32)
    params = init_params(k_p, state_dim, action_dim, hidden)
    fused = fuse_params(params)

    ref = critic_reference(state, action, params)

    # f32 operands: numerically equivalent path.
    out = critic_forward(state, action, fused, compute_dtype=jnp.float32)
    jax.block_until_ready(out)
    assert out.shape == (batch, 1)
    assert jnp.allclose(out, ref, atol=2e-5, rtol=2e-5), "f32 mismatch vs reference"

    # bf16 streaming operands (f32 accumulation): halves HBM traffic on v5e/v6e/v7x.
    out_bf16 = critic_forward(state, action, fused, compute_dtype=jnp.bfloat16)
    jax.block_until_ready(out_bf16)
    assert out_bf16.shape == (batch, 1)
    assert jnp.allclose(out_bf16, ref, atol=1e-1, rtol=1e-1), "bf16 mismatch vs reference"

    print("KERNEL_OK")
</pallas_src>

<mosaic_0001>
module attributes {stable_mosaic.version = 11 : i64} {
  func.func @critic_kernel(%arg0: i32, %arg1: memref<16x24xf32, #tpu.memory_space<vmem>>, %arg2: memref<24x128xf32, #tpu.memory_space<vmem>>, %arg3: memref<1x128xf32, #tpu.memory_space<vmem>>, %arg4: memref<1x128xf32, #tpu.memory_space<vmem>>, %arg5: memref<1x1xf32, #tpu.memory_space<smem>>, %arg6: memref<16x1xf32, #tpu.memory_space<vmem>>) attributes {dimension_semantics = [#tpu.dimension_semantics<parallel>], iteration_bounds = array<i64: 1>, scalar_prefetch = 0 : i64, scratch_operands = 0 : i64, tpu.core_type = #tpu.core_type<tc>, window_params = [{transform_indices = @transform_0, window_bounds = array<i64: 16, 24>}, {pipeline_mode = #tpu.pipeline_mode<synchronous>, transform_indices = @transform_1, window_bounds = array<i64: 24, 128>}, {pipeline_mode = #tpu.pipeline_mode<synchronous>, transform_indices = @transform_2, window_bounds = array<i64: 1, 128>}, {pipeline_mode = #tpu.pipeline_mode<synchronous>, transform_indices = @transform_3, window_bounds = array<i64: 1, 128>}, {transform_indices = @transform_4, window_bounds = array<i64: 1, 1>}, {transform_indices = @transform_5, window_bounds = array<i64: 16, 1>}]} {
    %c0 = arith.constant 0 : index
    %c0_0 = arith.constant 0 : index
    %0 = vector.load %arg1[%c0, %c0_0] : memref<16x24xf32, #tpu.memory_space<vmem>>, vector<16x24xf32>
    %c0_1 = arith.constant 0 : index
    %c0_2 = arith.constant 0 : index
    %1 = vector.load %arg2[%c0_1, %c0_2] : memref<24x128xf32, #tpu.memory_space<vmem>>, vector<24x128xf32>
    %cst = arith.constant dense<0.000000e+00> : vector<16x128xf32>
    %2 = tpu.matmul %0, %1, %cst {dimension_numbers = #tpu.dot_dimension_numbers<[1], [0], [0], [1], [0, 0, 1, 1], [], []>} : vector<16x24xf32>, vector<24x128xf32>, vector<16x128xf32> -> vector<16x128xf32>
    %c0_3 = arith.constant 0 : index
    %c0_4 = arith.constant 0 : index
    %3 = vector.load %arg3[%c0_3, %c0_4] : memref<1x128xf32, #tpu.memory_space<vmem>>, vector<1x128xf32>
    %4 = vector.broadcast %3 : vector<1x128xf32> to vector<16x128xf32>
    %5 = arith.addf %2, %4 : vector<16x128xf32>
    %cst_5 = arith.constant 0.000000e+00 : f32
    %6 = vector.broadcast %cst_5 : f32 to vector<16x128xf32>
    %7 = arith.maximumf %5, %6 : vector<16x128xf32>
    %c0_6 = arith.constant 0 : index
    %c0_7 = arith.constant 0 : index
    %8 = vector.load %arg4[%c0_6, %c0_7] : memref<1x128xf32, #tpu.memory_space<vmem>>, vector<1x128xf32>
    %9 = vector.broadcast %8 : vector<1x128xf32> to vector<16x128xf32>
    %10 = arith.mulf %7, %9 : vector<16x128xf32>
    %cst_8 = arith.constant dense<0.000000e+00> : vector<16xf32>
    %11 = vector.multi_reduction <add>, %10, %cst_8 [1] : vector<16x128xf32> to vector<16xf32>
    %12 = vector.shape_cast %11 : vector<16xf32> to vector<16x1xf32>
    %c0_9 = arith.constant 0 : index
    %c0_10 = arith.constant 0 : index
    %13 = memref.load %arg5[%c0_9, %c0_10] : memref<1x1xf32, #tpu.memory_space<smem>>
    %14 = vector.broadcast %13 : f32 to vector<16x1xf32>
    %15 = arith.addf %12, %14 : vector<16x1xf32>
    %c0_11 = arith.constant 0 : index
    %c0_12 = arith.constant 0 : index
    %16 = vector.load %arg6[%c0_11, %c0_12] : memref<16x1xf32, #tpu.memory_space<vmem>>, vector<16x1xf32>
    tpu.vector_store %arg6[%c0_11, %c0_12], %15 {strides = array<i32>} : memref<16x1xf32, #tpu.memory_space<vmem>>, vector<16x1xf32>,
    return
  }
  func.func @transform_0(%arg0: i32) -> (i32, i32) {
    %c0_i32 = arith.constant 0 : i32
    %c0_i32_0 = arith.constant 0 : i32
    return %arg0, %c0_i32 : i32, i32
  }
  func.func @transform_1(%arg0: i32) -> (i32, i32) {
    %c0_i32 = arith.constant 0 : i32
    %c0_i32_0 = arith.constant 0 : i32
    %c0_i32_1 = arith.constant 0 : i32
    return %c0_i32, %c0_i32_0 : i32, i32
  }
  func.func @transform_2(%arg0: i32) -> (i32, i32) {
    %c0_i32 = arith.constant 0 : i32
    %c0_i32_0 = arith.constant 0 : i32
    %c0_i32_1 = arith.constant 0 : i32
    return %c0_i32, %c0_i32_0 : i32, i32
  }
  func.func @transform_3(%arg0: i32) -> (i32, i32) {
    %c0_i32 = arith.constant 0 : i32
    %c0_i32_0 = arith.constant 0 : i32
    %c0_i32_1 = arith.constant 0 : i32
    return %c0_i32, %c0_i32_0 : i32, i32
  }
  func.func @transform_4(%arg0: i32) -> (i32, i32) {
    %c0_i32 = arith.constant 0 : i32
    %c0_i32_0 = arith.constant 0 : i32
    %c0_i32_1 = arith.constant 0 : i32
    return %c0_i32, %c0_i32_0 : i32, i32
  }
  func.func @transform_5(%arg0: i32) -> (i32, i32) {
    %c0_i32 = arith.constant 0 : i32
    %c0_i32_0 = arith.constant 0 : i32
    return %arg0, %c0_i32 : i32, i32
  }
}

</mosaic_0001>

<llo_original>
// kernel: tpu_custom_call.1
$region0: #{tpu_custom_call.1}
  #allocation0 [shape = 'u32[]', space=smem, size = 0x4, offset = 0x4, fixed_abs, tag = 'smem constant byte address 0x4 - core index']
  #allocation1 [shape = 'u32[144,128]{1,0:T(1,128)}', space=vmem, size = 0x12000, scoped, tag = 'internal scratch']
  #allocation2 [shape = 'f32[1,1]{1,0:T(1,128)S(6)}', space=smem, size = 0x200, scoped, tag = 'scoped memory for tpu_custom_call.1']
  %s0 = inlined_call_operand.hbm [shape: f32[8,24], index: 0, kind: input, shape index: {}]
  %s1 = inlined_call_operand.hbm [shape: f32[24,128], index: 1, kind: input, shape index: {}]
  %s2 = inlined_call_operand.vmem [shape: f32[1,128], index: 2, kind: input, shape index: {}]
  %s3 = inlined_call_operand.vmem [shape: f32[1,128], index: 3, kind: input, shape index: {}]
  %s4 = inlined_call_operand.<no memory space> [shape: f32[1,1], index: 4, kind: input, shape index: {}]
  %s5 = inlined_call_operand.vmem [shape: f32[8,1], index: 5, kind: output, shape index: {}]
  %s6 = sld [smem:[#allocation0]]
  $region72: #{tpu_custom_call.1} parent=0
    _
  %s8 = ssub.s32 1, %s6
  %s9 = scalar_select 0, %s8, %s6
  %10 = sst [smem:[#allocation2]] %s4
  $region1: #{tpu_custom_call.1} parent=0
    #allocation3 [shape = 'u8[8192]{0}', space=vmem, size = 0x2000, scoped, tag = 'input window, operand 0, single buffered']
    #allocation4 [shape = 's32[1]{0}', space=sflag, size = 0x4, scoped, tag = 'scoped memory for tpu_custom_call.1']
    #allocation5 [shape = 'u8[12288]{0}', space=vmem, size = 0x3000, scoped, tag = 'input window, operand 1, single buffered']
    #allocation6 [shape = 's32[1]{0}', space=sflag, size = 0x4, scoped, tag = 'scoped memory for tpu_custom_call.1']
    #allocation7 [shape = 'u8[8192]{0}', space=vmem, size = 0x2000, scoped, tag = 'output window, operand 0, single buffered']
    %11 = vsyncpa [#allocation4], 0
    %12 = vsyncpa [#allocation6], 0
    // Predicated region
    $region2: #{tpu_custom_call.1} parent=1 // pred_check
      _
    $region3: #{tpu_custom_call.1} parent=1 // pred_check_branch
      %14 = sbr.rel (0) target = $region5
    $region4: #{tpu_custom_call.1} parent=1 // pred_region
      %s16 = ssub.s32 256, 128
      %17 = vsyncadd [#allocation4], %s16
      %s18 = sshll.u32 [#allocation3], 4
      %s19 = int_to_ptr.vmem [resolvable:$true] %s18
      %24 = dma.hbm_to_vmem [thread:$0]  %s0, 128, %s19, [#allocation4], 128, 128, 8
    $region5: #{tpu_custom_call.1} parent=1 // pred_fallthru
      _
    // Predicated region
    $region6: #{tpu_custom_call.1} parent=1 // pred_check
      _
    $region7: #{tpu_custom_call.1} parent=1 // pred_check_branch
      %26 = sbr.rel (0) target = $region9
    $region8: #{tpu_custom_call.1} parent=1 // pred_region
      %s28 = ssub.s32 384, 384
      %29 = vsyncadd [#allocation6], %s28
      %s30 = sshll.u32 [#allocation5], 4
      %s31 = int_to_ptr.vmem [resolvable:$true] %s30
      %36 = dma.hbm_to_vmem [thread:$0]  %s1, 384, %s31, [#allocation6], 128, 128, 8
    $region9: #{tpu_custom_call.1} parent=1 // pred_fallthru
      _
    // Predicated region
    $region10: #{tpu_custom_call.1} parent=1 // pred_check
      _
    $region11: #{tpu_custom_call.1} parent=1 // pred_check_branch
      %38 = sbr.rel (0) target = $region13
    $region12: #{tpu_custom_call.1} parent=1 // pred_region
      _
    $region13: #{tpu_custom_call.1} parent=1 // pred_fallthru
      _
    // Predicated region
    $region14: #{tpu_custom_call.1} parent=1 // pred_check
      _
    $region15: #{tpu_custom_call.1} parent=1 // pred_check_branch
      %40 = sbr.rel (0) target = $region17
    $region16: #{tpu_custom_call.1} parent=1 // pred_region
      _
    $region17: #{tpu_custom_call.1} parent=1 // pred_fallthru
      _
    // Predicated region
    $region18: #{tpu_custom_call.1} parent=1 // pred_check
      _
    $region19: #{tpu_custom_call.1} parent=1 // pred_check_branch
      %42 = sbr.rel (0) target = $region21
    $region20: #{tpu_custom_call.1} parent=1 // pred_region
      _
    $region21: #{tpu_custom_call.1} parent=1 // pred_fallthru
      _
    // Predicated region
    $region22: #{tpu_custom_call.1} parent=1 // pred_check
      _
    $region23: #{tpu_custom_call.1} parent=1 // pred_check_branch
      %44 = sbr.rel (0) target = $region25
    $region24: #{tpu_custom_call.1} parent=1 // pred_region
      %45 = dma.done [#allocation4], 256
    $region25: #{tpu_custom_call.1} parent=1 // pred_fallthru
      _
    // Predicated region
    $region26: #{tpu_custom_call.1} parent=1 // pred_check
      _
    $region27: #{tpu_custom_call.1} parent=1 // pred_check_branch
      %47 = sbr.rel (0) target = $region29
    $region28: #{tpu_custom_call.1} parent=1 // pred_region
      %48 = dma.done [#allocation6], 384
    $region29: #{tpu_custom_call.1} parent=1 // pred_fallthru
      _
    %v49 = vld [vmem:[#allocation3] sm:$0xff]
    %v50 = vld [vmem:[#allocation3 + $0x8] sm:$0xff]
    %v51 = vld [vmem:[#allocation5] sm:$0xff]
    %v52 = vld [vmem:[#allocation5 + $0x8] sm:$0xff]
    %v53 = vld [vmem:[#allocation5 + $0x10] sm:$0xff]
    %v54 = vld [vmem:[%s2] sm:$0x1]
    %v56 = vlaneseq
    %v57 = vshrl.u32 %v56, 7
    %v58 = vsub.s32 0, %v57
    %v59 = vrot.slane %v54, %v58
    %vm61 = vcmask 195584
    %v63 = vsel %vm61, %v49, 0
    %v66 = vsel %vm61, %v50, 0
    %68 = vmatprep.subr.mxu0 0.0
    %69 = vmatpush1.msra.mxu0 %v51
    %70 = vmatprep.subr.mxu0 0.0
    %71 = vmatpush1.msra.mxu0 %v52
    %72 = vmatprep.subr.mxu0 0.0
    %73 = vmatpush1.msra.mxu0 %v53
    %74 = vmatprep.subr.mxu0 0.0
    %75 = vmatpush1.msra.mxu0 0.0
    %76 = vmatprep.subr.mxu0 0.0
    %77 = vmatpush1.msra.mxu0 0.0
    %78 = vmatprep.subr.mxu0 0.0
    %79 = vmatpush1.msra.mxu0 0.0
    %80 = vmatprep.subr.mxu0 0.0
    %81 = vmatpush1.msra.mxu0 0.0
    %82 = vmatprep.subr.mxu0 0.0
    %83 = vmatpush1.msra.mxu0 0.0
    %84 = vmatprep.subr.mxu0 0.0
    %85 = vmatpush1.msra.mxu0 0.0
    %86 = vmatprep.subr.mxu0 0.0
    %87 = vmatpush1.msra.mxu0 0.0
    %88 = vmatprep.subr.mxu0 0.0
    %89 = vmatpush1.msra.mxu0 0.0
    %90 = vmatprep.subr.mxu0 0.0
    %91 = vmatpush1.msra.mxu0 0.0
    %92 = vmatprep.subr.mxu0 0.0
    %93 = vmatpush1.msra.mxu0 0.0
    %94 = vmatprep.subr.mxu0 0.0
    %95 = vmatpush1.msra.mxu0 0.0
    %96 = vmatprep.subr.mxu0 0.0
    %97 = vmatpush1.msra.mxu0 0.0
    %98 = vmatprep.subr.mxu0 0.0
    %99 = vmatpush1.msra.mxu0 0.0
    %100 = vmatprep.subr.mxu0 0.0
    %101 = vmatpush1.msra.mxu0 0.0
    %102 = vmatprep.subr.mxu0 0.0
    %103 = vmatpush1.msra.mxu0 0.0
    %104 = vmatprep.subr.mxu0 0.0
    %105 = vmatpush1.msra.mxu0 0.0
    %106 = vmatprep.subr.mxu0 0.0
    %107 = vmatpush1.msra.mxu0 0.0
    %108 = vmatprep.subr.mxu0 0.0
    %109 = vmatpush1.msra.mxu0 0.0
    %110 = vmatprep.subr.mxu0 0.0
    %111 = vmatpush1.msra.mxu0 0.0
    %112 = vmatprep.subr.mxu0 0.0
    %113 = vmatpush1.msra.mxu0 0.0
    %114 = vmatprep.subr.mxu0 0.0
    %115 = vmatpush1.msra.mxu0 0.0
    %116 = vmatprep.subr.mxu0 0.0
    %117 = vmatpush1.msra.mxu0 0.0
    %118 = vmatprep.subr.mxu0 0.0
    %119 = vmatpush1.msra.mxu0 0.0
    %120 = vmatprep.subr.mxu0 0.0
    %121 = vmatpush1.msra.mxu0 0.0
    %122 = vmatprep.subr.mxu0 0.0
    %123 = vmatpush1.msra.mxu0 0.0
    %124 = vmatprep.subr.mxu0 0.0
    %125 = vmatpush1.msra.mxu0 0.0
    %126 = vmatprep.subr.mxu0 0.0
    %127 = vmatpush1.msra.mxu0 0.0
    %128 = vmatprep.subr.mxu0 0.0
    %129 = vmatpush1.msra.mxu0 0.0
    %130 = vmatprep.subr.mxu0 0.0
    %131 = vmatpush1.msra.mxu0 0.0
    %132 = vmatprep.mubr.f32.mxu0 0.0
    %133 = vmatmul.mubr.f32.gmra.mrb[0].mxu0 %v63
    %v134 = vpop.f32.mrb[0].mxu0
    %v135 = vadd.f32 %v59, %v134
    %v136 = vpop.f32.mrb[0].mxu0
    %137 = vmatprep.mubr.f32.mxu0 0.0
    %138 = vmatmul.mubr.f32.gmra.mrb[0].mxu0 %v66
    %v139 = vpop.f32.mrb[0].mxu0
    %v140 = vadd.f32 %v59, %v139
    %v141 = vpop.f32.mrb[0].mxu0
    %142 = vdwg.mxu0
    %v143 = vmax.f32 %v135, 0.0
    %v144 = vmax.f32 %v140, 0.0
    %v145 = vld [vmem:[%s3] sm:$0x1]
    %v147 = vlaneseq
    %v148 = vshrl.u32 %v147, 7
    %v149 = vsub.s32 0, %v148
    %v150 = vrot.slane %v145, %v149
    %v152 = vmul.f32 %v143, %v150
    %v153 = vmul.f32 %v144, %v150
    %154 = vadd.xlane.f32.xlu0 %v152
    %v155 = vpop.xlane.xlu0 %154
    %156 = vadd.xlane.f32.xlu0 %v153
    %v157 = vpop.xlane.xlu0 %156
    %s158 = sld [smem:[#allocation2]]
    %v159 = vstv %s158
    %v160 = vadd.f32 %v155, %v159
    %v161 = vadd.f32 %v157, %v159
    %vm162 = vcmask 7168
    %163 = vst.msk [vmem:[#allocation7] sm:$0xff] %vm162, %v160
    %164 = vst.msk [vmem:[#allocation7 + $0x8] sm:$0xff] %vm162, %v161
    // Predicated region
    $region30: #{tpu_custom_call.1} parent=1 // pred_check
      _
    $region31: #{tpu_custom_call.1} parent=1 // pred_check_branch
      %166 = sbr.rel (0) target = $region33
    $region32: #{tpu_custom_call.1} parent=1 // pred_region
      // Predicated region
      $region34: #{tpu_custom_call.1} parent=32 // pred_check
        _
      $region35: #{tpu_custom_call.1} parent=32 // pred_check_branch
        %168 = sbr.rel (0) target = $region37
      $region36: #{tpu_custom_call.1} parent=32 // pred_region
        // Predicated region
        $region38: #{tpu_custom_call.1} parent=36 // pred_check
          _
        $region39: #{tpu_custom_call.1} parent=36 // pred_check_branch
          %170 = sbr.rel (0) target = $region41
        $region40: #{tpu_custom_call.1} parent=36 // pred_region
          // Predicated region
          $region53: #{tpu_custom_call.1} parent=40 // pred_check
            _
          $region54: #{tpu_custom_call.1} parent=40 // pred_check_branch
            %185 = sbr.rel (0) target = $region56
          $region55: #{tpu_custom_call.1} parent=40 // pred_region
            loop: start=0, step=1, limit=1
            $region57: #{tpu_custom_call.1} parent=55 // loop_pre_header
              _
            $region58: #{tpu_custom_call.1} parent=55 // loop_header
              %s187 = sphi 0, %s191
              %p188 = scmp.ge.s32.totalorder %s187, 1
              %s192 = sphi [#allocation7], [#allocation7]
              %s193 = sphi %s5, %s5
            $region59: #{tpu_custom_call.1} parent=55 // loop_header_branch
              %190 = sbr.rel (%p188) target = $region63
            $region60: #{tpu_custom_call.1} parent=55 // loop_body
              %v194 = vld [vmem:[%s192] sm:$0xff]
              %195 = vst [vmem:[%s193] sm:$0xff] %v194
            $region61: #{tpu_custom_call.1} parent=55 // loop_footer
              %s191 = sadd.s32 1, %s187
            $region62: #{tpu_custom_call.1} parent=55 // loop_footer_branch
              %186 = sbr.rel target = $region58
            $region63: #{tpu_custom_call.1} parent=55 // loop_exit
              _
          $region56: #{tpu_custom_call.1} parent=40 // pred_fallthru
            _
          // Predicated region
          $region64: #{tpu_custom_call.1} parent=40 // pred_check
            _
          $region65: #{tpu_custom_call.1} parent=40 // pred_check_branch
            %197 = sbr.rel target = $region67
          $region66: #{tpu_custom_call.1} parent=40 // pred_region
            _
          $region67: #{tpu_custom_call.1} parent=40 // pred_fallthru
            _
        $region41: #{tpu_custom_call.1} parent=36 // pred_fallthru
          _
        // Predicated region
        $region42: #{tpu_custom_call.1} parent=36 // pred_check
          _
        $region43: #{tpu_custom_call.1} parent=36 // pred_check_branch
          %172 = sbr.rel target = $region45
        $region44: #{tpu_custom_call.1} parent=36 // pred_region
          loop: start=0, step=1, limit=1
          $region46: #{tpu_custom_call.1} parent=44 // loop_pre_header
            _
          $region47: #{tpu_custom_call.1} parent=44 // loop_header
            %s175 = sphi 0, %s179
            %p176 = scmp.ge.s32.totalorder %s175, 1
            %s180 = sphi [#allocation7], [#allocation7]
            %s181 = sphi %s5, %s5
          $region48: #{tpu_custom_call.1} parent=44 // loop_header_branch
            %178 = sbr.rel (%p176) target = $region52
          $region49: #{tpu_custom_call.1} parent=44 // loop_body
            %v182 = vld [vmem:[%s180] sm:$0xff]
            %183 = vst [vmem:[%s181] sm:$0xff] %v182
          $region50: #{tpu_custom_call.1} parent=44 // loop_footer
            %s179 = sadd.s32 1, %s175
          $region51: #{tpu_custom_call.1} parent=44 // loop_footer_branch
            %174 = sbr.rel target = $region47
          $region52: #{tpu_custom_call.1} parent=44 // loop_exit
            _
        $region45: #{tpu_custom_call.1} parent=36 // pred_fallthru
          _
      $region37: #{tpu_custom_call.1} parent=32 // pred_fallthru
        _
      %198 = vnop
    $region33: #{tpu_custom_call.1} parent=1 // pred_fallthru
      _
    // Predicated region
    $region68: #{tpu_custom_call.1} parent=1 // pred_check
      _
    $region69: #{tpu_custom_call.1} parent=1 // pred_check_branch
      %200 = sbr.rel (0) target = $region71
    $region70: #{tpu_custom_call.1} parent=1 // pred_region
      _
    $region71: #{tpu_custom_call.1} parent=1 // pred_fallthru
      _
    %201 = vsyncpa [#allocation4], 1
    %202 = vsyncpa [#allocation6], 1

</llo_original>
